<compile_context>
chip_gen: v5e
topology: v5e:2x2
jax: 0.10.0
libtpu: 0.0.40
codegen_flags: <defaults>
</compile_context>

<pallas_src>
import functools

import jax
import jax.numpy as jnp
from jax import lax
from jax.experimental import pallas as pl
from jax.experimental.pallas import tpu as pltpu


def _round_up(x, m):
    return (x + m - 1) // m * m


def _pad_gate_cols(w, h, h_pad):
    """(rows, 4*h) -> (rows, 4*h_pad): each of the 4 gate column-blocks starts
    on a 128-lane boundary; padded columns are zero (=> padded gates stay
    inert: i=f=o=sigmoid(0), g=tanh(0)=0, so padded h/c columns remain 0)."""
    rows = w.shape[0]
    out = jnp.zeros((rows, 4 * h_pad), w.dtype)
    for g in range(4):
        out = out.at[:, g * h_pad:g * h_pad + h].set(w[:, g * h:(g + 1) * h])
    return out


def _lstm_recurrence_kernel(seq_len, gx_ref, whh_ref, h_out_ref, h_sc, c_sc):
    """One grid step == one chunk of `t_chunk` LSTM time steps.

    gx_ref   : (t_chunk, Bp, 4*Hp) precomputed X@W_ih^T + bias (f32), this chunk
    whh_ref  : (Hp, 4*Hp)          recurrent weights (bf16), resident
    h_out_ref: (Bp, Hp)            final hidden state (written on last chunk)
    h_sc,c_sc: (Bp, Hp)            recurrent state, persists across grid steps
    """
    chunk = pl.program_id(0)
    t_chunk = gx_ref.shape[0]
    h_pad = h_sc.shape[1]

    @pl.when(chunk == 0)
    def _init():
        h_sc[...] = jnp.zeros_like(h_sc)
        c_sc[...] = jnp.zeros_like(c_sc)

    base = chunk * t_chunk

    def step(t, carry):
        h, c = carry
        # Only the recurrent projection runs per step: h @ W_hh^T on the MXU
        # (bf16 operands, f32 accumulation) + the precomputed gate slab.
        gates = gx_ref[t] + jnp.dot(h.astype(jnp.bfloat16), whh_ref[...],
                                    preferred_element_type=jnp.float32)
        # PyTorch gate order: i, f, g, o — each slice is a full 128-lane block.
        i_g = jax.nn.sigmoid(gates[:, 0 * h_pad:1 * h_pad])
        f_g = jax.nn.sigmoid(gates[:, 1 * h_pad:2 * h_pad])
        g_g = jnp.tanh(gates[:, 2 * h_pad:3 * h_pad])
        o_g = jax.nn.sigmoid(gates[:, 3 * h_pad:4 * h_pad])
        c_new = f_g * c + i_g * g_g
        h_new = o_g * jnp.tanh(c_new)
        # Mask steps past the true sequence length (ragged last chunk).
        valid = (base + t) < seq_len
        return jnp.where(valid, h_new, h), jnp.where(valid, c_new, c)

    h, c = lax.fori_loop(0, t_chunk, step, (h_sc[...], c_sc[...]), unroll=True)
    h_sc[...] = h
    c_sc[...] = c

    @pl.when(chunk == pl.num_programs(0) - 1)
    def _finalize():
        h_out_ref[...] = h          # lane-dense (Bp, Hp) store, unmasked vst


@functools.partial(jax.jit, static_argnames=("time_chunk",))
def lstm_forward(tokens, emb_table, w_ih, w_hh, b_ih, b_hh, w_out, b_out,
                 *, time_chunk=None):
    """tokens: (T, B) int32 (seq-first).  Returns logits (B, output_dim) f32."""
    seq_len, batch = tokens.shape
    emb_dim = emb_table.shape[1]
    hidden = w_hh.shape[1]

    b_pad = _round_up(batch, 8)       # sublane alignment
    h_pad = _round_up(hidden, 128)    # lane alignment (gate slices = full vregs)

    # --- glue: embedding lookup (nn.Embedding) ---
    x = emb_table[tokens]                                     # (T, B, E) f32
    x = jnp.pad(x, ((0, 0), (0, b_pad - batch), (0, 0)))      # (T, Bp, E)

    # --- hoisted input projection: ONE big MXU matmul over all T*Bp rows,
    #     bias (b_ih + b_hh) folded in here, so the per-step kernel body is
    #     just h @ W_hh^T + gx[t] followed by the nonlinearity. ---
    wih_t = _pad_gate_cols(w_ih.T, hidden, h_pad)                        # (E, 4Hp)
    bias = _pad_gate_cols((b_ih + b_hh).reshape(1, 4 * hidden), hidden, h_pad)
    gates_x = jnp.dot(
        x.reshape(seq_len * b_pad, emb_dim).astype(jnp.bfloat16),
        wih_t.astype(jnp.bfloat16),
        preferred_element_type=jnp.float32)
    gates_x = gates_x.reshape(seq_len, b_pad, 4 * h_pad) + bias          # f32

    # --- recurrent weights: padded, bf16 (MXU-native), resident in VMEM ---
    whh_t = jnp.zeros((h_pad, 4 * h_pad), jnp.float32)
    whh_t = whh_t.at[:hidden].set(_pad_gate_cols(w_hh.T, hidden, h_pad))
    whh_t = whh_t.astype(jnp.bfloat16)

    if time_chunk is None:
        time_chunk = min(seq_len, 32)
    n_chunks = pl.cdiv(seq_len, time_chunk)

    cost = pl.CostEstimate(
        flops=2 * seq_len * b_pad * h_pad * 4 * h_pad,   # recurrent matmul
        transcendentals=5 * seq_len * b_pad * h_pad,     # 3x sigmoid + 2x tanh
        bytes_accessed=gates_x.size * 4 + whh_t.size * 2 + b_pad * h_pad * 4,
    )

    h_final = pl.pallas_call(
        functools.partial(_lstm_recurrence_kernel, seq_len),
        out_shape=jax.ShapeDtypeStruct((b_pad, h_pad), jnp.float32),
        grid_spec=pltpu.PrefetchScalarGridSpec(
            num_scalar_prefetch=0,
            grid=(n_chunks,),
            in_specs=[
                # precomputed gate slab, pipelined one time-chunk per grid step
                pl.BlockSpec((time_chunk, b_pad, 4 * h_pad),
                             lambda c: (c, 0, 0)),
                # W_hh^T: constant index_map -> fetched once, stays resident.
                # NOTE: for realistic H (e.g. 1024) on v7x (64 MiB VMEM), add
                # pipeline_mode=pl.Buffered(1) to single-buffer it, keep it
                # bf16, and raise CompilerParams(vmem_limit_bytes=...); at
                # these toy shapes the default double buffer is ~128 KiB.
                pl.BlockSpec((h_pad, 4 * h_pad), lambda c: (0, 0)),
            ],
            out_specs=pl.BlockSpec((b_pad, h_pad), lambda c: (0, 0)),
            scratch_shapes=[pltpu.VMEM((b_pad, h_pad), jnp.float32),   # h
                            pltpu.VMEM((b_pad, h_pad), jnp.float32)],  # c
        ),
        compiler_params=pltpu.CompilerParams(
            dimension_semantics=("arbitrary",)),   # recurrence: sequential
        cost_estimate=cost,
    )(gates_x, whh_t)

    # --- final Linear runs exactly once -> left to XLA (out of the kernel).
    # feature = hidden[-1, :, :]; num_linear=1 => the hidden Linear stack is
    # empty, matching the module defaults.
    feature = h_final[:batch, :hidden]
    return feature @ w_out.T + b_out


def reference_forward(tokens, emb_table, w_ih, w_hh, b_ih, b_hh, w_out, b_out):
    """Pure-f32 JAX reference matching torch.nn.LSTM + Linear semantics."""
    x = emb_table[tokens]                       # (T, B, E)
    _, B, _ = x.shape
    H = w_hh.shape[1]

    def step(carry, xt):
        h, c = carry
        gates = xt @ w_ih.T + b_ih + h @ w_hh.T + b_hh
        i, f, g, o = jnp.split(gates, 4, axis=-1)
        i = jax.nn.sigmoid(i)
        f = jax.nn.sigmoid(f)
        g = jnp.tanh(g)
        o = jax.nn.sigmoid(o)
        c = f * c + i * g
        h = o * jnp.tanh(c)
        return (h, c), None

    init = (jnp.zeros((B, H), jnp.float32), jnp.zeros((B, H), jnp.float32))
    (h, _), _ = lax.scan(step, init, x)
    return h @ w_out.T + b_out                  # hidden[-1, :, :] -> Linear


if __name__ == "__main__":
    # Small shapes consistent with the module.
    vocab_size, emb_dim, hidden_dim, output_dim = 50, 32, 32, 4
    seq_len, batch = 8, 2

    key = jax.random.PRNGKey(0)
    ks = jax.random.split(key, 8)
    scale = 1.0 / jnp.sqrt(hidden_dim)

    emb_table = jax.random.normal(ks[0], (vocab_size, emb_dim), jnp.float32)
    w_ih = jax.random.uniform(ks[1], (4 * hidden_dim, emb_dim),
                              jnp.float32, -scale, scale)
    w_hh = jax.random.uniform(ks[2], (4 * hidden_dim, hidden_dim),
                              jnp.float32, -scale, scale)
    b_ih = jax.random.uniform(ks[3], (4 * hidden_dim,),
                              jnp.float32, -scale, scale)
    b_hh = jax.random.uniform(ks[4], (4 * hidden_dim,),
                              jnp.float32, -scale, scale)
    w_out = jax.random.uniform(ks[5], (output_dim, hidden_dim),
                               jnp.float32, -scale, scale)
    b_out = jax.random.uniform(ks[6], (output_dim,),
                               jnp.float32, -scale, scale)

    tokens = jax.random.randint(ks[7], (seq_len, batch), 0, vocab_size,
                                dtype=jnp.int32)   # batch.text[0]: (T, B)

    # time_chunk=4 -> 2 grid steps: exercises the cross-chunk h/c carry path.
    out = lstm_forward(tokens, emb_table, w_ih, w_hh, b_ih, b_hh,
                       w_out, b_out, time_chunk=4)
    out = jax.block_until_ready(out)

    ref = reference_forward(tokens, emb_table, w_ih, w_hh, b_ih, b_hh,
                            w_out, b_out)
    assert out.shape == (batch, output_dim)
    # bf16 MXU operands (f32 accumulation) vs a pure-f32 reference -> looser tol.
    assert jnp.allclose(out, ref, atol=2e-2, rtol=2e-2), \
        float(jnp.max(jnp.abs(out - ref)))

    print("KERNEL_OK")
</pallas_src>

<mosaic_0001>
module attributes {stable_mosaic.version = 11 : i64} {
  func.func @_lstm_recurrence_kernel(%arg0: i32, %arg1: memref<4x8x512xf32, #tpu.memory_space<vmem>>, %arg2: memref<128x512xbf16, #tpu.memory_space<vmem>>, %arg3: memref<8x128xf32, #tpu.memory_space<vmem>>, %arg4: memref<8x128xf32, #tpu.memory_space<vmem>>, %arg5: memref<8x128xf32, #tpu.memory_space<vmem>>) attributes {dimension_semantics = [#tpu.dimension_semantics<arbitrary>], iteration_bounds = array<i64: 2>, scalar_prefetch = 0 : i64, scratch_operands = 2 : i64, tpu.core_type = #tpu.core_type<tc>, window_params = [{transform_indices = @transform_0, window_bounds = array<i64: 4, 8, 512>}, {pipeline_mode = #tpu.pipeline_mode<synchronous>, transform_indices = @transform_1, window_bounds = array<i64: 128, 512>}, {pipeline_mode = #tpu.pipeline_mode<synchronous>, transform_indices = @transform_2, window_bounds = array<i64: 8, 128>}]} {
    %c0_i32 = arith.constant 0 : i32
    %0 = arith.cmpi eq, %arg0, %c0_i32 : i32
    %1 = arith.extui %0 : i1 to i32
    %c0_i32_0 = arith.constant 0 : i32
    %2 = arith.cmpi ne, %1, %c0_i32_0 : i32
    scf.if %2 {
      %cst_46 = arith.constant 0.000000e+00 : f32
      %155 = vector.broadcast %cst_46 : f32 to vector<8x128xf32>
      %c0_47 = arith.constant 0 : index
      %c0_48 = arith.constant 0 : index
      %156 = vector.load %arg4[%c0_47, %c0_48] : memref<8x128xf32, #tpu.memory_space<vmem>>, vector<8x128xf32>
      tpu.vector_store %arg4[%c0_47, %c0_48], %155 {strides = array<i32>} : memref<8x128xf32, #tpu.memory_space<vmem>>, vector<8x128xf32>,
      %cst_49 = arith.constant 0.000000e+00 : f32
      %157 = vector.broadcast %cst_49 : f32 to vector<8x128xf32>
      %c0_50 = arith.constant 0 : index
      %c0_51 = arith.constant 0 : index
      %158 = vector.load %arg5[%c0_50, %c0_51] : memref<8x128xf32, #tpu.memory_space<vmem>>, vector<8x128xf32>
      tpu.vector_store %arg5[%c0_50, %c0_51], %157 {strides = array<i32>} : memref<8x128xf32, #tpu.memory_space<vmem>>, vector<8x128xf32>,
    } else {
    }
    %c4_i32 = arith.constant 4 : i32
    %3 = arith.muli %arg0, %c4_i32 : i32
    %c0 = arith.constant 0 : index
    %c0_1 = arith.constant 0 : index
    %4 = vector.load %arg4[%c0, %c0_1] : memref<8x128xf32, #tpu.memory_space<vmem>>, vector<8x128xf32>
    %c0_2 = arith.constant 0 : index
    %c0_3 = arith.constant 0 : index
    %5 = vector.load %arg5[%c0_2, %c0_3] : memref<8x128xf32, #tpu.memory_space<vmem>>, vector<8x128xf32>
    %c0_i32_4 = arith.constant 0 : i32
    %6 = arith.index_cast %c0_i32_4 : i32 to index
    %c0_5 = arith.constant 0 : index
    %c0_6 = arith.constant 0 : index
    %7 = vector.load %arg1[%6, %c0_5, %c0_6] : memref<4x8x512xf32, #tpu.memory_space<vmem>>, vector<1x8x512xf32>
    %8 = vector.shape_cast %7 : vector<1x8x512xf32> to vector<8x512xf32>
    %9 = arith.truncf %4 : vector<8x128xf32> to vector<8x128xbf16>
    %c0_7 = arith.constant 0 : index
    %c0_8 = arith.constant 0 : index
    %10 = vector.load %arg2[%c0_7, %c0_8] : memref<128x512xbf16, #tpu.memory_space<vmem>>, vector<128x512xbf16>
    %cst = arith.constant dense<0.000000e+00> : vector<8x512xf32>
    %11 = tpu.matmul %9, %10, %cst {dimension_numbers = #tpu.dot_dimension_numbers<[1], [0], [0], [1], [0, 0, 1, 1], [], []>} : vector<8x128xbf16>, vector<128x512xbf16>, vector<8x512xf32> -> vector<8x512xf32>
    %12 = arith.addf %8, %11 : vector<8x512xf32>
    %13 = vector.extract_strided_slice %12 {offsets = [0, 0], sizes = [8, 128], strides = [1, 1]} : vector<8x512xf32> to vector<8x128xf32>
    %14 = arith.negf %13 : vector<8x128xf32>
    %15 = math.exp %14 : vector<8x128xf32>
    %cst_9 = arith.constant 1.000000e+00 : f32
    %16 = vector.broadcast %cst_9 : f32 to vector<8x128xf32>
    %17 = arith.addf %16, %15 : vector<8x128xf32>
    %18 = arith.divf %16, %17 : vector<8x128xf32>
    %19 = vector.extract_strided_slice %12 {offsets = [0, 128], sizes = [8, 128], strides = [1, 1]} : vector<8x512xf32> to vector<8x128xf32>
    %20 = arith.negf %19 : vector<8x128xf32>
    %21 = math.exp %20 : vector<8x128xf32>
    %cst_10 = arith.constant 1.000000e+00 : f32
    %22 = vector.broadcast %cst_10 : f32 to vector<8x128xf32>
    %23 = arith.addf %22, %21 : vector<8x128xf32>
    %24 = arith.divf %22, %23 : vector<8x128xf32>
    %25 = vector.extract_strided_slice %12 {offsets = [0, 256], sizes = [8, 128], strides = [1, 1]} : vector<8x512xf32> to vector<8x128xf32>
    %26 = math.tanh %25 : vector<8x128xf32>
    %27 = vector.extract_strided_slice %12 {offsets = [0, 384], sizes = [8, 128], strides = [1, 1]} : vector<8x512xf32> to vector<8x128xf32>
    %28 = arith.negf %27 : vector<8x128xf32>
    %29 = math.exp %28 : vector<8x128xf32>
    %cst_11 = arith.constant 1.000000e+00 : f32
    %30 = vector.broadcast %cst_11 : f32 to vector<8x128xf32>
    %31 = arith.addf %30, %29 : vector<8x128xf32>
    %32 = arith.divf %30, %31 : vector<8x128xf32>
    %33 = arith.mulf %24, %5 : vector<8x128xf32>
    %34 = arith.mulf %18, %26 : vector<8x128xf32>
    %35 = arith.addf %33, %34 : vector<8x128xf32>
    %36 = math.tanh %35 : vector<8x128xf32>
    %37 = arith.mulf %32, %36 : vector<8x128xf32>
    %38 = arith.addi %3, %c0_i32_4 : i32
    %c8_i32 = arith.constant 8 : i32
    %39 = arith.cmpi slt, %38, %c8_i32 : i32
    %40 = arith.select %39, %37, %4 : vector<8x128xf32>
    %41 = arith.select %39, %35, %5 : vector<8x128xf32>
    %c1_i32 = arith.constant 1 : i32
    %42 = arith.index_cast %c1_i32 : i32 to index
    %c0_12 = arith.constant 0 : index
    %c0_13 = arith.constant 0 : index
    %43 = vector.load %arg1[%42, %c0_12, %c0_13] : memref<4x8x512xf32, #tpu.memory_space<vmem>>, vector<1x8x512xf32>
    %44 = vector.shape_cast %43 : vector<1x8x512xf32> to vector<8x512xf32>
    %45 = arith.truncf %40 : vector<8x128xf32> to vector<8x128xbf16>
    %c0_14 = arith.constant 0 : index
    %c0_15 = arith.constant 0 : index
    %46 = vector.load %arg2[%c0_14, %c0_15] : memref<128x512xbf16, #tpu.memory_space<vmem>>, vector<128x512xbf16>
    %cst_16 = arith.constant dense<0.000000e+00> : vector<8x512xf32>
    %47 = tpu.matmul %45, %46, %cst_16 {dimension_numbers = #tpu.dot_dimension_numbers<[1], [0], [0], [1], [0, 0, 1, 1], [], []>} : vector<8x128xbf16>, vector<128x512xbf16>, vector<8x512xf32> -> vector<8x512xf32>
    %48 = arith.addf %44, %47 : vector<8x512xf32>
    %49 = vector.extract_strided_slice %48 {offsets = [0, 0], sizes = [8, 128], strides = [1, 1]} : vector<8x512xf32> to vector<8x128xf32>
    %50 = arith.negf %49 : vector<8x128xf32>
    %51 = math.exp %50 : vector<8x128xf32>
    %cst_17 = arith.constant 1.000000e+00 : f32
    %52 = vector.broadcast %cst_17 : f32 to vector<8x128xf32>
    %53 = arith.addf %52, %51 : vector<8x128xf32>
    %54 = arith.divf %52, %53 : vector<8x128xf32>
    %55 = vector.extract_strided_slice %48 {offsets = [0, 128], sizes = [8, 128], strides = [1, 1]} : vector<8x512xf32> to vector<8x128xf32>
    %56 = arith.negf %55 : vector<8x128xf32>
    %57 = math.exp %56 : vector<8x128xf32>
    %cst_18 = arith.constant 1.000000e+00 : f32
    %58 = vector.broadcast %cst_18 : f32 to vector<8x128xf32>
    %59 = arith.addf %58, %57 : vector<8x128xf32>
    %60 = arith.divf %58, %59 : vector<8x128xf32>
    %61 = vector.extract_strided_slice %48 {offsets = [0, 256], sizes = [8, 128], strides = [1, 1]} : vector<8x512xf32> to vector<8x128xf32>
    %62 = math.tanh %61 : vector<8x128xf32>
    %63 = vector.extract_strided_slice %48 {offsets = [0, 384], sizes = [8, 128], strides = [1, 1]} : vector<8x512xf32> to vector<8x128xf32>
    %64 = arith.negf %63 : vector<8x128xf32>
    %65 = math.exp %64 : vector<8x128xf32>
    %cst_19 = arith.constant 1.000000e+00 : f32
    %66 = vector.broadcast %cst_19 : f32 to vector<8x128xf32>
    %67 = arith.addf %66, %65 : vector<8x128xf32>
    %68 = arith.divf %66, %67 : vector<8x128xf32>
    %69 = arith.mulf %60, %41 : vector<8x128xf32>
    %70 = arith.mulf %54, %62 : vector<8x128xf32>
    %71 = arith.addf %69, %70 : vector<8x128xf32>
    %72 = math.tanh %71 : vector<8x128xf32>
    %73 = arith.mulf %68, %72 : vector<8x128xf32>
    %74 = arith.addi %3, %c1_i32 : i32
    %c8_i32_20 = arith.constant 8 : i32
    %75 = arith.cmpi slt, %74, %c8_i32_20 : i32
    %76 = arith.select %75, %73, %40 : vector<8x128xf32>
    %77 = arith.select %75, %71, %41 : vector<8x128xf32>
    %c2_i32 = arith.constant 2 : i32
    %78 = arith.index_cast %c2_i32 : i32 to index
    %c0_21 = arith.constant 0 : index
    %c0_22 = arith.constant 0 : index
    %79 = vector.load %arg1[%78, %c0_21, %c0_22] : memref<4x8x512xf32, #tpu.memory_space<vmem>>, vector<1x8x512xf32>
    %80 = vector.shape_cast %79 : vector<1x8x512xf32> to vector<8x512xf32>
    %81 = arith.truncf %76 : vector<8x128xf32> to vector<8x128xbf16>
    %c0_23 = arith.constant 0 : index
    %c0_24 = arith.constant 0 : index
    %82 = vector.load %arg2[%c0_23, %c0_24] : memref<128x512xbf16, #tpu.memory_space<vmem>>, vector<128x512xbf16>
    %cst_25 = arith.constant dense<0.000000e+00> : vector<8x512xf32>
    %83 = tpu.matmul %81, %82, %cst_25 {dimension_numbers = #tpu.dot_dimension_numbers<[1], [0], [0], [1], [0, 0, 1, 1], [], []>} : vector<8x128xbf16>, vector<128x512xbf16>, vector<8x512xf32> -> vector<8x512xf32>
    %84 = arith.addf %80, %83 : vector<8x512xf32>
    %85 = vector.extract_strided_slice %84 {offsets = [0, 0], sizes = [8, 128], strides = [1, 1]} : vector<8x512xf32> to vector<8x128xf32>
    %86 = arith.negf %85 : vector<8x128xf32>
    %87 = math.exp %86 : vector<8x128xf32>
    %cst_26 = arith.constant 1.000000e+00 : f32
    %88 = vector.broadcast %cst_26 : f32 to vector<8x128xf32>
    %89 = arith.addf %88, %87 : vector<8x128xf32>
    %90 = arith.divf %88, %89 : vector<8x128xf32>
    %91 = vector.extract_strided_slice %84 {offsets = [0, 128], sizes = [8, 128], strides = [1, 1]} : vector<8x512xf32> to vector<8x128xf32>
    %92 = arith.negf %91 : vector<8x128xf32>
    %93 = math.exp %92 : vector<8x128xf32>
    %cst_27 = arith.constant 1.000000e+00 : f32
    %94 = vector.broadcast %cst_27 : f32 to vector<8x128xf32>
    %95 = arith.addf %94, %93 : vector<8x128xf32>
    %96 = arith.divf %94, %95 : vector<8x128xf32>
    %97 = vector.extract_strided_slice %84 {offsets = [0, 256], sizes = [8, 128], strides = [1, 1]} : vector<8x512xf32> to vector<8x128xf32>
    %98 = math.tanh %97 : vector<8x128xf32>
    %99 = vector.extract_strided_slice %84 {offsets = [0, 384], sizes = [8, 128], strides = [1, 1]} : vector<8x512xf32> to vector<8x128xf32>
    %100 = arith.negf %99 : vector<8x128xf32>
    %101 = math.exp %100 : vector<8x128xf32>
    %cst_28 = arith.constant 1.000000e+00 : f32
    %102 = vector.broadcast %cst_28 : f32 to vector<8x128xf32>
    %103 = arith.addf %102, %101 : vector<8x128xf32>
    %104 = arith.divf %102, %103 : vector<8x128xf32>
    %105 = arith.mulf %96, %77 : vector<8x128xf32>
    %106 = arith.mulf %90, %98 : vector<8x128xf32>
    %107 = arith.addf %105, %106 : vector<8x128xf32>
    %108 = math.tanh %107 : vector<8x128xf32>
    %109 = arith.mulf %104, %108 : vector<8x128xf32>
    %110 = arith.addi %3, %c2_i32 : i32
    %c8_i32_29 = arith.constant 8 : i32
    %111 = arith.cmpi slt, %110, %c8_i32_29 : i32
    %112 = arith.select %111, %109, %76 : vector<8x128xf32>
    %113 = arith.select %111, %107, %77 : vector<8x128xf32>
    %c3_i32 = arith.constant 3 : i32
    %114 = arith.index_cast %c3_i32 : i32 to index
    %c0_30 = arith.constant 0 : index
    %c0_31 = arith.constant 0 : index
    %115 = vector.load %arg1[%114, %c0_30, %c0_31] : memref<4x8x512xf32, #tpu.memory_space<vmem>>, vector<1x8x512xf32>
    %116 = vector.shape_cast %115 : vector<1x8x512xf32> to vector<8x512xf32>
    %117 = arith.truncf %112 : vector<8x128xf32> to vector<8x128xbf16>
    %c0_32 = arith.constant 0 : index
    %c0_33 = arith.constant 0 : index
    %118 = vector.load %arg2[%c0_32, %c0_33] : memref<128x512xbf16, #tpu.memory_space<vmem>>, vector<128x512xbf16>
    %cst_34 = arith.constant dense<0.000000e+00> : vector<8x512xf32>
    %119 = tpu.matmul %117, %118, %cst_34 {dimension_numbers = #tpu.dot_dimension_numbers<[1], [0], [0], [1], [0, 0, 1, 1], [], []>} : vector<8x128xbf16>, vector<128x512xbf16>, vector<8x512xf32> -> vector<8x512xf32>
    %120 = arith.addf %116, %119 : vector<8x512xf32>
    %121 = vector.extract_strided_slice %120 {offsets = [0, 0], sizes = [8, 128], strides = [1, 1]} : vector<8x512xf32> to vector<8x128xf32>
    %122 = arith.negf %121 : vector<8x128xf32>
    %123 = math.exp %122 : vector<8x128xf32>
    %cst_35 = arith.constant 1.000000e+00 : f32
    %124 = vector.broadcast %cst_35 : f32 to vector<8x128xf32>
    %125 = arith.addf %124, %123 : vector<8x128xf32>
    %126 = arith.divf %124, %125 : vector<8x128xf32>
    %127 = vector.extract_strided_slice %120 {offsets = [0, 128], sizes = [8, 128], strides = [1, 1]} : vector<8x512xf32> to vector<8x128xf32>
    %128 = arith.negf %127 : vector<8x128xf32>
    %129 = math.exp %128 : vector<8x128xf32>
    %cst_36 = arith.constant 1.000000e+00 : f32
    %130 = vector.broadcast %cst_36 : f32 to vector<8x128xf32>
    %131 = arith.addf %130, %129 : vector<8x128xf32>
    %132 = arith.divf %130, %131 : vector<8x128xf32>
    %133 = vector.extract_strided_slice %120 {offsets = [0, 256], sizes = [8, 128], strides = [1, 1]} : vector<8x512xf32> to vector<8x128xf32>
    %134 = math.tanh %133 : vector<8x128xf32>
    %135 = vector.extract_strided_slice %120 {offsets = [0, 384], sizes = [8, 128], strides = [1, 1]} : vector<8x512xf32> to vector<8x128xf32>
    %136 = arith.negf %135 : vector<8x128xf32>
    %137 = math.exp %136 : vector<8x128xf32>
    %cst_37 = arith.constant 1.000000e+00 : f32
    %138 = vector.broadcast %cst_37 : f32 to vector<8x128xf32>
    %139 = arith.addf %138, %137 : vector<8x128xf32>
    %140 = arith.divf %138, %139 : vector<8x128xf32>
    %141 = arith.mulf %132, %113 : vector<8x128xf32>
    %142 = arith.mulf %126, %134 : vector<8x128xf32>
    %143 = arith.addf %141, %142 : vector<8x128xf32>
    %144 = math.tanh %143 : vector<8x128xf32>
    %145 = arith.mulf %140, %144 : vector<8x128xf32>
    %146 = arith.addi %3, %c3_i32 : i32
    %c8_i32_38 = arith.constant 8 : i32
    %147 = arith.cmpi slt, %146, %c8_i32_38 : i32
    %148 = arith.select %147, %145, %112 : vector<8x128xf32>
    %149 = arith.select %147, %143, %113 : vector<8x128xf32>
    %c4_i32_39 = arith.constant 4 : i32
    %c0_40 = arith.constant 0 : index
    %c0_41 = arith.constant 0 : index
    %150 = vector.load %arg4[%c0_40, %c0_41] : memref<8x128xf32, #tpu.memory_space<vmem>>, vector<8x128xf32>
    tpu.vector_store %arg4[%c0_40, %c0_41], %148 {strides = array<i32>} : memref<8x128xf32, #tpu.memory_space<vmem>>, vector<8x128xf32>,
    %c0_42 = arith.constant 0 : index
    %c0_43 = arith.constant 0 : index
    %151 = vector.load %arg5[%c0_42, %c0_43] : memref<8x128xf32, #tpu.memory_space<vmem>>, vector<8x128xf32>
    tpu.vector_store %arg5[%c0_42, %c0_43], %149 {strides = array<i32>} : memref<8x128xf32, #tpu.memory_space<vmem>>, vector<8x128xf32>,
    %c1_i32_44 = arith.constant 1 : i32
    %152 = arith.cmpi eq, %arg0, %c1_i32_44 : i32
    %153 = arith.extui %152 : i1 to i32
    %c0_i32_45 = arith.constant 0 : i32
    %154 = arith.cmpi ne, %153, %c0_i32_45 : i32
    scf.if %154 {
      %c0_46 = arith.constant 0 : index
      %c0_47 = arith.constant 0 : index
      %155 = vector.load %arg3[%c0_46, %c0_47] : memref<8x128xf32, #tpu.memory_space<vmem>>, vector<8x128xf32>
      tpu.vector_store %arg3[%c0_46, %c0_47], %148 {strides = array<i32>} : memref<8x128xf32, #tpu.memory_space<vmem>>, vector<8x128xf32>,
    } else {
    }
    return
  }
  func.func @transform_0(%arg0: i32) -> (i32, i32, i32) {
    %c0_i32 = arith.constant 0 : i32
    %c0_i32_0 = arith.constant 0 : i32
    %c0_i32_1 = arith.constant 0 : i32
    return %arg0, %c0_i32, %c0_i32_0 : i32, i32, i32
  }
  func.func @transform_1(%arg0: i32) -> (i32, i32) {
    %c0_i32 = arith.constant 0 : i32
    %c0_i32_0 = arith.constant 0 : i32
    %c0_i32_1 = arith.constant 0 : i32
    return %c0_i32, %c0_i32_0 : i32, i32
  }
  func.func @transform_2(%arg0: i32) -> (i32, i32) {
    %c0_i32 = arith.constant 0 : i32
    %c0_i32_0 = arith.constant 0 : i32
    %c0_i32_1 = arith.constant 0 : i32
    return %c0_i32, %c0_i32_0 : i32, i32
  }
}

</mosaic_0001>

<llo_original>
// kernel: lstm_forward.1
$region0: #{lstm_forward.1}
  #allocation0 [shape = 'u32[]', space=smem, size = 0x4, offset = 0x4, fixed_abs, tag = 'smem constant byte address 0x4 - core index']
  #allocation1 [shape = 'u32[72,128]{1,0:T(1,128)}', space=vmem, size = 0x9000, scoped, tag = 'internal scratch']
  #allocation2 [shape = 'f32[8,128]{1,0:T(8,128)}', space=vmem, size = 0x1000, scoped, tag = 'scratch operand']
  #allocation3 [shape = 'f32[8,128]{1,0:T(8,128)}', space=vmem, size = 0x1000, scoped, tag = 'scratch operand']
  %s0 = inlined_call_operand.vmem [shape: f32[8,8,512], index: 0, kind: input, shape index: {}]
  %s1 = inlined_call_operand.vmem [shape: bf16[128,512], index: 1, kind: input, shape index: {}]
  %s2 = inlined_call_operand.vmem [shape: f32[8,128], index: 2, kind: output, shape index: {}]
  %s3 = sld [smem:[#allocation0]]
  $region49: #{lstm_forward.1} parent=0
    _
  %s5 = ssub.s32 1, %s3
  %s6 = scalar_select 0, %s5, %s3
  loop: start=0, step=1, limit=4
  $region2: #{lstm_forward.1} parent=0 // loop_pre_header
    _
  $region3: #{lstm_forward.1} parent=0 // loop_header
    %s8 = sphi 0, %s12
    %p9 = scmp.ge.s32.totalorder %s8, 4
    %s18 = sphi 0, %s20
    %s21 = sphi 0, %s18
    %s22 = sphi 0, %s21
    %s38 = sphi 0, %s22
    %s42 = sphi 0, %s42
    %s44 = sphi 0, %s42
    %s45 = sphi 0, %s44
    %s59 = sphi 0, %s45
    %s63 = sphi 0, %s63
    %s65 = sphi 0, %s63
    %s66 = sphi 0, %s65
    %s80 = sphi 0, %s66
  $region4: #{lstm_forward.1} parent=0 // loop_header_branch
    %11 = sbr.rel (%p9) target = $region8
  $region5: #{lstm_forward.1} parent=0 // loop_body
    %s13 = ssub.s32 %s8, 1
    %s14 = ssub.s32 %s8, 2
    %s15 = sadd.s32 %s8, 1
    %s16 = ssub.s32 %s8, %s15
    %p17 = scmp.eq.s32.totalorder %s16, 0
    %s19 = sadd.s32 %s18, 1
    %s20 = scalar_select %p17, %s18, %s19
    %p23 = pneg %p17
    %p24 = scmp.eq.s32.totalorder %s8, 1
    %p25 = por %p23, %p24
    %p26 = scmp.ne.s32.totalorder %s18, %s21
    %p27 = scmp.eq.s32.totalorder %s8, 0
    %p28 = por %p26, %p27
    %p29 = scmp.ne.s32.totalorder %s18, %s21
    %p30 = scmp.eq.s32.totalorder %s13, 1
    %p31 = por %p29, %p30
    %p32 = scmp.ne.s32.totalorder %s21, %s22
    %p33 = scmp.eq.s32.totalorder %s13, 0
    %p34 = por %p32, %p33
    %p35 = scmp.ne.s32.totalorder %s21, %s22
    %p36 = scmp.eq.s32.totalorder %s14, 1
    %p37 = por %p35, %p36
    %p39 = scmp.ne.s32.totalorder %s22, %s38
    %p40 = scmp.eq.s32.totalorder %s14, 0
    %p41 = por %p39, %p40
    %s43 = sadd.s32 %s42, 1
    %p46 = scmp.eq.s32.totalorder %s8, 1
    %p47 = scmp.ne.s32.totalorder %s42, %s44
    %p48 = scmp.eq.s32.totalorder %s8, 0
    %p49 = por %p47, %p48
    %p50 = scmp.ne.s32.totalorder %s42, %s44
    %p51 = scmp.eq.s32.totalorder %s13, 1
    %p52 = por %p50, %p51
    %p53 = scmp.ne.s32.totalorder %s44, %s45
    %p54 = scmp.eq.s32.totalorder %s13, 0
    %p55 = por %p53, %p54
    %p56 = scmp.ne.s32.totalorder %s44, %s45
    %p57 = scmp.eq.s32.totalorder %s14, 1
    %p58 = por %p56, %p57
    %p60 = scmp.ne.s32.totalorder %s45, %s59
    %p61 = scmp.eq.s32.totalorder %s14, 0
    %p62 = por %p60, %p61
    %s64 = sadd.s32 %s63, 1
    %p67 = scmp.eq.s32.totalorder %s8, 1
    %p68 = scmp.ne.s32.totalorder %s63, %s65
    %p69 = scmp.eq.s32.totalorder %s8, 0
    %p70 = por %p68, %p69
    %p71 = scmp.ne.s32.totalorder %s63, %s65
    %p72 = scmp.eq.s32.totalorder %s13, 1
    %p73 = por %p71, %p72
    %p74 = scmp.ne.s32.totalorder %s65, %s66
    %p75 = scmp.eq.s32.totalorder %s13, 0
    %p76 = por %p74, %p75
    %p77 = scmp.ne.s32.totalorder %s65, %s66
    %p78 = scmp.eq.s32.totalorder %s14, 1
    %p79 = por %p77, %p78
    %p81 = scmp.ne.s32.totalorder %s66, %s80
    %p82 = scmp.eq.s32.totalorder %s14, 0
    %p83 = por %p81, %p82
    %p84 = scmp.le.s32.totalorder 1, %s8
    %p85 = scmp.lt.s32.totalorder %s8, 3
    %p86 = pnand %p84, %p85
    %p87 = pneg %p86
    // Predicated region
    $region9: #{lstm_forward.1} parent=5 // pred_check
      _
    $region10: #{lstm_forward.1} parent=5 // pred_check_branch
      %89 = sbr.rel (%p86) target = $region12
    $region11: #{lstm_forward.1} parent=5 // pred_region
      %s90 = ssub.s32 %s8, 1
      // Predicated region
      $region13: #{lstm_forward.1} parent=11 // pred_check
        %p91 = pneg %p55
      $region14: #{lstm_forward.1} parent=11 // pred_check_branch
        %93 = sbr.rel (%p91) target = $region16
      $region15: #{lstm_forward.1} parent=11 // pred_region
        _
      $region16: #{lstm_forward.1} parent=11 // pred_fallthru
        _
    $region12: #{lstm_forward.1} parent=5 // pred_fallthru
      _
    %p94 = scmp.lt.s32.totalorder %s8, 2
    // Predicated region
    $region17: #{lstm_forward.1} parent=5 // pred_check
      %p95 = pneg %p94
    $region18: #{lstm_forward.1} parent=5 // pred_check_branch
      %97 = sbr.rel (%p95) target = $region20
    $region19: #{lstm_forward.1} parent=5 // pred_region
      // Predicated region
      $region21: #{lstm_forward.1} parent=19 // pred_check
        %p98 = pneg %p28
      $region22: #{lstm_forward.1} parent=19 // pred_check_branch
        %100 = sbr.rel (%p98) target = $region24
      $region23: #{lstm_forward.1} parent=19 // pred_region
        %s101 = smul.u32 4, %s8
        %p102 = scmp.lt.s32.totalorder %s101, 7
        %s103 = scalar_select %p102, %s101, 7
        %s104 = smul.addr %s103, 4
        %s105 = smul.addr %s104, 8
        %s106 = scalar_lea.vmem %s0, %s105
        %s107 = smul.u32 4, %s8
      $region24: #{lstm_forward.1} parent=19 // pred_fallthru
        _
    $region20: #{lstm_forward.1} parent=5 // pred_fallthru
      _
    %p108 = scmp.le.s32.totalorder 1, %s8
    %p109 = scmp.lt.s32.totalorder %s8, 3
    %p110 = pnand %p108, %p109
    %p111 = pneg %p110
    // Predicated region
    $region25: #{lstm_forward.1} parent=5 // pred_check
      _
    $region26: #{lstm_forward.1} parent=5 // pred_check_branch
      %113 = sbr.rel (%p110) target = $region28
    $region27: #{lstm_forward.1} parent=5 // pred_region
      %s114 = ssub.s32 %s8, 1
      %s115 = smul.u32 4, %s13
      %p116 = scmp.lt.s32.totalorder %s115, 7
      %s117 = scalar_select %p116, %s115, 7
      %s118 = smul.addr %s117, 4
      %s119 = smul.addr %s118, 8
      %s120 = scalar_lea.vmem %s0, %s119
      %p121 = pneg %p34
      %p122 = pneg %p31
      %p123 = pneg %p55
      %p124 = pneg %p52
      %p125 = pneg %p76
      %p126 = pneg %p73
      %s127 = smul.u32 4, %s13
      %p128 = scmp.lt.s32.totalorder %s127, 7
      %s129 = scalar_select %p128, %s127, 7
      %s130 = smul.addr %s129, 4
      %s131 = smul.addr %s130, 8
      %s132 = scalar_lea.vmem %s0, %s131
      %s133 = smul.u32 4, %s13
      %p134 = scmp.eq.s32.totalorder %s13, 0
      // Predicated region
      $region29: #{lstm_forward.1} parent=27 // pred_check
        %p135 = pneg %p134
      $region30: #{lstm_forward.1} parent=27 // pred_check_branch
        %137 = sbr.rel (%p135) target = $region32
      $region31: #{lstm_forward.1} parent=27 // pred_region
        %138 = vst [vmem:[#allocation2] sm:$0xff] 0.0
        %139 = vst [vmem:[#allocation3] sm:$0xff] 0.0
      $region32: #{lstm_forward.1} parent=27 // pred_fallthru
        _
      %s140 = smul.u32 %s13, 4
      %v141 = vld [vmem:[#allocation2] sm:$0xff]
      %v142 = vld [vmem:[#allocation3] sm:$0xff]
      %v143 = vld [vmem:[%s132] sm:$0xff]
      %v144 = vld [vmem:[%s132 + $0x8] sm:$0xff]
      %v145 = vld [vmem:[%s132 + $0x10] sm:$0xff]
      %v146 = vld [vmem:[%s132 + $0x18] sm:$0xff]
      %v147 = vpack.c.bf16 %v141, %v141
      %v148 = vld [vmem:[%s1] sm:$0xff]
      %v149 = vld [vmem:[%s1 + $0x8] sm:$0xff]
      %v150 = vld [vmem:[%s1 + $0x10] sm:$0xff]
      %v151 = vld [vmem:[%s1 + $0x18] sm:$0xff]
      %v152 = vld [vmem:[%s1 + $0x20] sm:$0xff]
      %v153 = vld [vmem:[%s1 + $0x28] sm:$0xff]
      %v154 = vld [vmem:[%s1 + $0x30] sm:$0xff]
      %v155 = vld [vmem:[%s1 + $0x38] sm:$0xff]
      %v156 = vld [vmem:[%s1 + $0x40] sm:$0xff]
      %v157 = vld [vmem:[%s1 + $0x48] sm:$0xff]
      %v158 = vld [vmem:[%s1 + $0x50] sm:$0xff]
      %v159 = vld [vmem:[%s1 + $0x58] sm:$0xff]
      %v160 = vld [vmem:[%s1 + $0x60] sm:$0xff]
      %v161 = vld [vmem:[%s1 + $0x68] sm:$0xff]
      %v162 = vld [vmem:[%s1 + $0x70] sm:$0xff]
      %v163 = vld [vmem:[%s1 + $0x78] sm:$0xff]
      %v164 = vld [vmem:[%s1 + $0x80] sm:$0xff]
      %v165 = vld [vmem:[%s1 + $0x88] sm:$0xff]
      %v166 = vld [vmem:[%s1 + $0x90] sm:$0xff]
      %v167 = vld [vmem:[%s1 + $0x98] sm:$0xff]
      %v168 = vld [vmem:[%s1 + $0xa0] sm:$0xff]
      %v169 = vld [vmem:[%s1 + $0xa8] sm:$0xff]
      %v170 = vld [vmem:[%s1 + $0xb0] sm:$0xff]
      %v171 = vld [vmem:[%s1 + $0xb8] sm:$0xff]
      %v172 = vld [vmem:[%s1 + $0xc0] sm:$0xff]
      %v173 = vld [vmem:[%s1 + $0xc8] sm:$0xff]
      %v174 = vld [vmem:[%s1 + $0xd0] sm:$0xff]
      %v175 = vld [vmem:[%s1 + $0xd8] sm:$0xff]
      %v176 = vld [vmem:[%s1 + $0xe0] sm:$0xff]
      %v177 = vld [vmem:[%s1 + $0xe8] sm:$0xff]
      %v178 = vld [vmem:[%s1 + $0xf0] sm:$0xff]
      %v179 = vld [vmem:[%s1 + $0xf8] sm:$0xff]
      %v212 = vunpack.c.l.b16 %v148
      %v213 = vunpack.c.h.b16 %v148
      %v214 = vunpack.c.l.b16 %v149
      %v215 = vunpack.c.h.b16 %v149
      %v216 = vunpack.c.l.b16 %v150
      %v217 = vunpack.c.h.b16 %v150
      %v218 = vunpack.c.l.b16 %v151
      %v219 = vunpack.c.h.b16 %v151
      %v220 = vunpack.c.l.b16 %v152
      %v221 = vunpack.c.h.b16 %v152
      %v222 = vunpack.c.l.b16 %v153
      %v223 = vunpack.c.h.b16 %v153
      %v224 = vunpack.c.l.b16 %v154
      %v225 = vunpack.c.h.b16 %v154
      %v226 = vunpack.c.l.b16 %v155
      %v227 = vunpack.c.h.b16 %v155
      %v228 = vunpack.c.l.b16 %v156
      %v229 = vunpack.c.h.b16 %v156
      %v230 = vunpack.c.l.b16 %v157
      %v231 = vunpack.c.h.b16 %v157
      %v232 = vunpack.c.l.b16 %v158
      %v233 = vunpack.c.h.b16 %v158
      %v234 = vunpack.c.l.b16 %v159
      %v235 = vunpack.c.h.b16 %v159
      %v236 = vunpack.c.l.b16 %v160
      %v237 = vunpack.c.h.b16 %v160
      %v238 = vunpack.c.l.b16 %v161
      %v239 = vunpack.c.h.b16 %v161
      %v240 = vunpack.c.l.b16 %v162
      %v241 = vunpack.c.h.b16 %v162
      %v242 = vunpack.c.l.b16 %v163
      %v243 = vunpack.c.h.b16 %v163
      %v244 = vunpack.c.l.b16 %v164
      %v245 = vunpack.c.h.b16 %v164
      %v246 = vunpack.c.l.b16 %v165
      %v247 = vunpack.c.h.b16 %v165
      %v248 = vunpack.c.l.b16 %v166
      %v249 = vunpack.c.h.b16 %v166
      %v250 = vunpack.c.l.b16 %v167
      %v251 = vunpack.c.h.b16 %v167
      %v252 = vunpack.c.l.b16 %v168
      %v253 = vunpack.c.h.b16 %v168
      %v254 = vunpack.c.l.b16 %v169
      %v255 = vunpack.c.h.b16 %v169
      %v256 = vunpack.c.l.b16 %v170
      %v257 = vunpack.c.h.b16 %v170
      %v258 = vunpack.c.l.b16 %v171
      %v259 = vunpack.c.h.b16 %v171
      %v260 = vunpack.c.l.b16 %v172
      %v261 = vunpack.c.h.b16 %v172
      %v262 = vunpack.c.l.b16 %v173
      %v263 = vunpack.c.h.b16 %v173
      %v264 = vunpack.c.l.b16 %v174
      %v265 = vunpack.c.h.b16 %v174
      %v266 = vunpack.c.l.b16 %v175
      %v267 = vunpack.c.h.b16 %v175
      %v268 = vunpack.c.l.b16 %v176
      %v269 = vunpack.c.h.b16 %v176
      %v270 = vunpack.c.l.b16 %v177
      %v271 = vunpack.c.h.b16 %v177
      %v272 = vunpack.c.l.b16 %v178
      %v273 = vunpack.c.h.b16 %v178
      %v274 = vunpack.c.l.b16 %v179
      %v275 = vunpack.c.h.b16 %v179
      %v276 = vpack.c.b16 %v216, %v212
      %v277 = vpack.c.b16 %v217, %v213
      %v278 = vpack.c.b16 %v218, %v214
      %v279 = vpack.c.b16 %v219, %v215
      %v280 = vpack.c.b16 %v224, %v220
      %v281 = vpack.c.b16 %v225, %v221
      %v282 = vpack.c.b16 %v226, %v222
      %v283 = vpack.c.b16 %v227, %v223
      %v284 = vpack.c.b16 %v232, %v228
      %v285 = vpack.c.b16 %v233, %v229
      %v286 = vpack.c.b16 %v234, %v230
      %v287 = vpack.c.b16 %v235, %v231
      %v288 = vpack.c.b16 %v240, %v236
      %v289 = vpack.c.b16 %v241, %v237
      %v290 = vpack.c.b16 %v242, %v238
      %v291 = vpack.c.b16 %v243, %v239
      %v292 = vpack.c.b16 %v248, %v244
      %v293 = vpack.c.b16 %v249, %v245
      %v294 = vpack.c.b16 %v250, %v246
      %v295 = vpack.c.b16 %v251, %v247
      %v296 = vpack.c.b16 %v256, %v252
      %v297 = vpack.c.b16 %v257, %v253
      %v298 = vpack.c.b16 %v258, %v254
      %v299 = vpack.c.b16 %v259, %v255
      %v300 = vpack.c.b16 %v264, %v260
      %v301 = vpack.c.b16 %v265, %v261
      %v302 = vpack.c.b16 %v266, %v262
      %v303 = vpack.c.b16 %v267, %v263
      %v304 = vpack.c.b16 %v272, %v268
      %v305 = vpack.c.b16 %v273, %v269
      %v306 = vpack.c.b16 %v274, %v270
      %v307 = vpack.c.b16 %v275, %v271
      %340 = vmatpush.bf16.msra.mxu0 %v304
      %341 = vmatpush.bf16.msra.mxu0 %v300
      %342 = vmatpush.bf16.msra.mxu0 %v296
      %343 = vmatpush.bf16.msra.mxu0 %v292
      %344 = vmatpush.bf16.msra.mxu0 %v288
      %345 = vmatpush.bf16.msra.mxu0 %v284
      %346 = vmatpush.bf16.msra.mxu0 %v280
      %347 = vmatpush.bf16.msra.mxu0 %v276
      %348 = vmatmul.bf16.gmra.mxu0 %v147
      %v349 = vpop.f32.mrf.mxu0
      %v350 = vadd.f32 0.0, %v349
      %v351 = vpop.f32.mrf.mxu0
      %352 = vdwg.mxu0
      %353 = vmatpush.bf16.msra.mxu0 %v305
      %354 = vmatpush.bf16.msra.mxu0 %v301
      %355 = vmatpush.bf16.msra.mxu0 %v297
      %356 = vmatpush.bf16.msra.mxu0 %v293
      %357 = vmatpush.bf16.msra.mxu0 %v289
      %358 = vmatpush.bf16.msra.mxu0 %v285
      %359 = vmatpush.bf16.msra.mxu0 %v281
      %360 = vmatpush.bf16.msra.mxu0 %v277
      %361 = vmatmul.bf16.gmra.mxu0 %v147
      %v362 = vpop.f32.mrf.mxu0
      %v363 = vadd.f32 0.0, %v362
      %v364 = vpop.f32.mrf.mxu0
      %365 = vdwg.mxu0
      %366 = vmatpush.bf16.msra.mxu0 %v306
      %367 = vmatpush.bf16.msra.mxu0 %v302
      %368 = vmatpush.bf16.msra.mxu0 %v298
      %369 = vmatpush.bf16.msra.mxu0 %v294
      %370 = vmatpush.bf16.msra.mxu0 %v290
      %371 = vmatpush.bf16.msra.mxu0 %v286
      %372 = vmatpush.bf16.msra.mxu0 %v282
      %373 = vmatpush.bf16.msra.mxu0 %v278
      %374 = vmatmul.bf16.gmra.mxu0 %v147
      %v375 = vpop.f32.mrf.mxu0
      %v376 = vadd.f32 0.0, %v375
      %v377 = vpop.f32.mrf.mxu0
      %378 = vdwg.mxu0
      %379 = vmatpush.bf16.msra.mxu0 %v307
      %380 = vmatpush.bf16.msra.mxu0 %v303
      %381 = vmatpush.bf16.msra.mxu0 %v299
      %382 = vmatpush.bf16.msra.mxu0 %v295
      %383 = vmatpush.bf16.msra.mxu0 %v291
      %384 = vmatpush.bf16.msra.mxu0 %v287
      %385 = vmatpush.bf16.msra.mxu0 %v283
      %386 = vmatpush.bf16.msra.mxu0 %v279
      %387 = vmatmul.bf16.gmra.mxu0 %v147
      %v388 = vpop.f32.mrf.mxu0
      %v389 = vadd.f32 0.0, %v388
      %v390 = vpop.f32.mrf.mxu0
      %391 = vdwg.mxu0
      %v392 = vadd.f32 %v143, %v350
      %v393 = vadd.f32 %v144, %v363
      %v394 = vadd.f32 %v145, %v376
      %v395 = vadd.f32 %v146, %v389
      %v396 = vxor.u32 %v392, 2147483648
      %v397 = vmul.f32 %v396, 1.442695
      %v398 = vpow.pop %v397
      %v399 = vadd.f32 %v398, 1.0
      %v400 = vrcp.pop %v399
      %v401 = vmul.f32 %v399, %v400
      %v402 = vsub.f32 1.0, %v401
      %v403 = vmul.f32 %v400, %v402
      %v404 = vadd.f32 %v400, %v403
      %vm405 = vweird.f32 %v399
      %vm406 = vweird.f32 %v400
      %vm407 = vmor %vm405, %vm406
      %v408 = vsel %vm407, %v400, %v404
      %v409 = vand.u32 2147483647, %v399
      %vm410 = vcmp.eq.f32.partialorder %v409, 8.507059e+37
      %v411 = vand.u32 %v399, 2147483648
      %v412 = vor.u32 1.1754944e-38, %v411
      %v413 = vsel %vm410, %v412, %v408
      %v414 = vmul.f32 1.0, %v413
      %v415 = vxor.u32 %v393, 2147483648
      %v416 = vmul.f32 %v415, 1.442695
      %v417 = vpow.pop %v416
      %v418 = vadd.f32 %v417, 1.0
      %v419 = vrcp.pop %v418
      %v420 = vmul.f32 %v418, %v419
      %v421 = vsub.f32 1.0, %v420
      %v422 = vmul.f32 %v419, %v421
      %v423 = vadd.f32 %v419, %v422
      %vm424 = vweird.f32 %v418
      %vm425 = vweird.f32 %v419
      %vm426 = vmor %vm424, %vm425
      %v427 = vsel %vm426, %v419, %v423
      %v428 = vand.u32 2147483647, %v418
      %vm429 = vcmp.eq.f32.partialorder %v428, 8.507059e+37
      %v430 = vand.u32 %v418, 2147483648
      %v431 = vor.u32 1.1754944e-38, %v430
      %v432 = vsel %vm429, %v431, %v427
      %v433 = vmul.f32 1.0, %v432
      %v434 = vtanh.pop %v394
      %v435 = vxor.u32 %v395, 2147483648
      %v436 = vmul.f32 %v435, 1.442695
      %v437 = vpow.pop %v436
      %v438 = vadd.f32 %v437, 1.0
      %v439 = vrcp.pop %v438
      %v440 = vmul.f32 %v438, %v439
      %v441 = vsub.f32 1.0, %v440
      %v442 = vmul.f32 %v439, %v441
      %v443 = vadd.f32 %v439, %v442
      %vm444 = vweird.f32 %v438
      %vm445 = vweird.f32 %v439
      %vm446 = vmor %vm444, %vm445
      %v447 = vsel %vm446, %v439, %v443
      %v448 = vand.u32 2147483647, %v438
      %vm449 = vcmp.eq.f32.partialorder %v448, 8.507059e+37
      %v450 = vand.u32 %v438, 2147483648
      %v451 = vor.u32 1.1754944e-38, %v450
      %v452 = vsel %vm449, %v451, %v447
      %v453 = vmul.f32 1.0, %v452
      %v454 = vmul.f32 %v433, %v142
      %v455 = vmul.f32 %v414, %v434
      %v456 = vadd.f32 %v454, %v455
      %v457 = vtanh.pop %v456
      %v458 = vmul.f32 %v453, %v457
      %p459 = scmp.lt.s32.totalorder %s140, 8
      %s460 = scalar_select %p459, 1, 0
      %v461 = vstv %s460
      %vm462 = vcmp.eq.s32.totalorder %v461, 1
      %v463 = vsel %vm462, %v458, %v141
      %v464 = vsel %vm462, %v456, %v142
      %s465 = scalar_lea.vmem %s132, 32
      %v466 = vld [vmem:[%s465] sm:$0xff]
      %v467 = vld [vmem:[%s465 + $0x8] sm:$0xff]
      %v468 = vld [vmem:[%s465 + $0x10] sm:$0xff]
      %v469 = vld [vmem:[%s465 + $0x18] sm:$0xff]
      %v470 = vpack.c.bf16 %v463, %v463
      %471 = vmatpush.bf16.msra.mxu0 %v304
      %472 = vmatpush.bf16.msra.mxu0 %v300
      %473 = vmatpush.bf16.msra.mxu0 %v296
      %474 = vmatpush.bf16.msra.mxu0 %v292
      %475 = vmatpush.bf16.msra.mxu0 %v288
      %476 = vmatpush.bf16.msra.mxu0 %v284
      %477 = vmatpush.bf16.msra.mxu0 %v280
      %478 = vmatpush.bf16.msra.mxu0 %v276
      %479 = vmatmul.bf16.gmra.mxu0 %v470
      %v480 = vpop.f32.mrf.mxu0
      %v481 = vadd.f32 0.0, %v480
      %v482 = vpop.f32.mrf.mxu0
      %483 = vdwg.mxu0
      %484 = vmatpush.bf16.msra.mxu0 %v305
      %485 = vmatpush.bf16.msra.mxu0 %v301
      %486 = vmatpush.bf16.msra.mxu0 %v297
      %487 = vmatpush.bf16.msra.mxu0 %v293
      %488 = vmatpush.bf16.msra.mxu0 %v289
      %489 = vmatpush.bf16.msra.mxu0 %v285
      %490 = vmatpush.bf16.msra.mxu0 %v281
      %491 = vmatpush.bf16.msra.mxu0 %v277
      %492 = vmatmul.bf16.gmra.mxu0 %v470
      %v493 = vpop.f32.mrf.mxu0
      %v494 = vadd.f32 0.0, %v493
      %v495 = vpop.f32.mrf.mxu0
      %496 = vdwg.mxu0
      %497 = vmatpush.bf16.msra.mxu0 %v306
      %498 = vmatpush.bf16.msra.mxu0 %v302
      %499 = vmatpush.bf16.msra.mxu0 %v298
      %500 = vmatpush.bf16.msra.mxu0 %v294
      %501 = vmatpush.bf16.msra.mxu0 %v290
      %502 = vmatpush.bf16.msra.mxu0 %v286
      %503 = vmatpush.bf16.msra.mxu0 %v282
      %504 = vmatpush.bf16.msra.mxu0 %v278
      %505 = vmatmul.bf16.gmra.mxu0 %v470
      %v506 = vpop.f32.mrf.mxu0
      %v507 = vadd.f32 0.0, %v506
      %v508 = vpop.f32.mrf.mxu0
      %509 = vdwg.mxu0
      %510 = vmatpush.bf16.msra.mxu0 %v307
      %511 = vmatpush.bf16.msra.mxu0 %v303
      %512 = vmatpush.bf16.msra.mxu0 %v299
      %513 = vmatpush.bf16.msra.mxu0 %v295
      %514 = vmatpush.bf16.msra.mxu0 %v291
      %515 = vmatpush.bf16.msra.mxu0 %v287
      %516 = vmatpush.bf16.msra.mxu0 %v283
      %517 = vmatpush.bf16.msra.mxu0 %v279
      %518 = vmatmul.bf16.gmra.mxu0 %v470
      %v519 = vpop.f32.mrf.mxu0
      %v520 = vadd.f32 0.0, %v519
      %v521 = vpop.f32.mrf.mxu0
      %522 = vdwg.mxu0
      %v523 = vadd.f32 %v466, %v481
      %v524 = vadd.f32 %v467, %v494
      %v525 = vadd.f32 %v468, %v507
      %v526 = vadd.f32 %v469, %v520
      %v527 = vxor.u32 %v523, 2147483648
      %v528 = vmul.f32 %v527, 1.442695
      %v529 = vpow.pop %v528
      %v530 = vadd.f32 %v529, 1.0
      %v531 = vrcp.pop %v530
      %v532 = vmul.f32 %v530, %v531
      %v533 = vsub.f32 1.0, %v532
      %v534 = vmul.f32 %v531, %v533
      %v535 = vadd.f32 %v531, %v534
      %vm536 = vweird.f32 %v530
      %vm537 = vweird.f32 %v531
      %vm538 = vmor %vm536, %vm537
      %v539 = vsel %vm538, %v531, %v535
      %v540 = vand.u32 2147483647, %v530
      %vm541 = vcmp.eq.f32.partialorder %v540, 8.507059e+37
      %v542 = vand.u32 %v530, 2147483648
      %v543 = vor.u32 1.1754944e-38, %v542
      %v544 = vsel %vm541, %v543, %v539
      %v545 = vmul.f32 1.0, %v544
      %v546 = vxor.u32 %v524, 2147483648
      %v547 = vmul.f32 %v546, 1.442695
      %v548 = vpow.pop %v547
      %v549 = vadd.f32 %v548, 1.0
      %v550 = vrcp.pop %v549
      %v551 = vmul.f32 %v549, %v550
      %v552 = vsub.f32 1.0, %v551
      %v553 = vmul.f32 %v550, %v552
      %v554 = vadd.f32 %v550, %v553
      %vm555 = vweird.f32 %v549
      %vm556 = vweird.f32 %v550
      %vm557 = vmor %vm555, %vm556
      %v558 = vsel %vm557, %v550, %v554
      %v559 = vand.u32 2147483647, %v549
      %vm560 = vcmp.eq.f32.partialorder %v559, 8.507059e+37
      %v561 = vand.u32 %v549, 2147483648
      %v562 = vor.u32 1.1754944e-38, %v561
      %v563 = vsel %vm560, %v562, %v558
      %v564 = vmul.f32 1.0, %v563
      %v565 = vtanh.pop %v525
      %v566 = vxor.u32 %v526, 2147483648
      %v567 = vmul.f32 %v566, 1.442695
      %v568 = vpow.pop %v567
      %v569 = vadd.f32 %v568, 1.0
      %v570 = vrcp.pop %v569
      %v571 = vmul.f32 %v569, %v570
      %v572 = vsub.f32 1.0, %v571
      %v573 = vmul.f32 %v570, %v572
      %v574 = vadd.f32 %v570, %v573
      %vm575 = vweird.f32 %v569
      %vm576 = vweird.f32 %v570
      %vm577 = vmor %vm575, %vm576
      %v578 = vsel %vm577, %v570, %v574
      %v579 = vand.u32 2147483647, %v569
      %vm580 = vcmp.eq.f32.partialorder %v579, 8.507059e+37
      %v581 = vand.u32 %v569, 2147483648
      %v582 = vor.u32 1.1754944e-38, %v581
      %v583 = vsel %vm580, %v582, %v578
      %v584 = vmul.f32 1.0, %v583
      %v585 = vmul.f32 %v564, %v464
      %v586 = vmul.f32 %v545, %v565
      %v587 = vadd.f32 %v585, %v586
      %v588 = vtanh.pop %v587
      %v589 = vmul.f32 %v584, %v588
      %s590 = sadd.s32 %s140, 1
      %p591 = scmp.lt.s32.totalorder %s590, 8
      %s592 = scalar_select %p591, 1, 0
      %v593 = vstv %s592
      %vm594 = vcmp.eq.s32.totalorder %v593, 1
      %v595 = vsel %vm594, %v589, %v463
      %v596 = vsel %vm594, %v587, %v464
      %s597 = scalar_lea.vmem %s132, 64
      %v598 = vld [vmem:[%s597] sm:$0xff]
      %v599 = vld [vmem:[%s597 + $0x8] sm:$0xff]
      %v600 = vld [vmem:[%s597 + $0x10] sm:$0xff]
      %v601 = vld [vmem:[%s597 + $0x18] sm:$0xff]
      %v602 = vpack.c.bf16 %v595, %v595
      %603 = vmatpush.bf16.msra.mxu0 %v304
      %604 = vmatpush.bf16.msra.mxu0 %v300
      %605 = vmatpush.bf16.msra.mxu0 %v296
      %606 = vmatpush.bf16.msra.mxu0 %v292
      %607 = vmatpush.bf16.msra.mxu0 %v288
      %608 = vmatpush.bf16.msra.mxu0 %v284
      %609 = vmatpush.bf16.msra.mxu0 %v280
      %610 = vmatpush.bf16.msra.mxu0 %v276
      %611 = vmatmul.bf16.gmra.mxu0 %v602
      %v612 = vpop.f32.mrf.mxu0
      %v613 = vadd.f32 0.0, %v612
      %v614 = vpop.f32.mrf.mxu0
      %615 = vdwg.mxu0
      %616 = vmatpush.bf16.msra.mxu0 %v305
      %617 = vmatpush.bf16.msra.mxu0 %v301
      %618 = vmatpush.bf16.msra.mxu0 %v297
      %619 = vmatpush.bf16.msra.mxu0 %v293
      %620 = vmatpush.bf16.msra.mxu0 %v289
      %621 = vmatpush.bf16.msra.mxu0 %v285
      %622 = vmatpush.bf16.msra.mxu0 %v281
      %623 = vmatpush.bf16.msra.mxu0 %v277
      %624 = vmatmul.bf16.gmra.mxu0 %v602
      %v625 = vpop.f32.mrf.mxu0
      %v626 = vadd.f32 0.0, %v625
      %v627 = vpop.f32.mrf.mxu0
      %628 = vdwg.mxu0
      %629 = vmatpush.bf16.msra.mxu0 %v306
      %630 = vmatpush.bf16.msra.mxu0 %v302
      %631 = vmatpush.bf16.msra.mxu0 %v298
      %632 = vmatpush.bf16.msra.mxu0 %v294
      %633 = vmatpush.bf16.msra.mxu0 %v290
      %634 = vmatpush.bf16.msra.mxu0 %v286
      %635 = vmatpush.bf16.msra.mxu0 %v282
      %636 = vmatpush.bf16.msra.mxu0 %v278
      %637 = vmatmul.bf16.gmra.mxu0 %v602
      %v638 = vpop.f32.mrf.mxu0
      %v639 = vadd.f32 0.0, %v638
      %v640 = vpop.f32.mrf.mxu0
      %641 = vdwg.mxu0
      %642 = vmatpush.bf16.msra.mxu0 %v307
      %643 = vmatpush.bf16.msra.mxu0 %v303
      %644 = vmatpush.bf16.msra.mxu0 %v299
      %645 = vmatpush.bf16.msra.mxu0 %v295
      %646 = vmatpush.bf16.msra.mxu0 %v291
      %647 = vmatpush.bf16.msra.mxu0 %v287
      %648 = vmatpush.bf16.msra.mxu0 %v283
      %649 = vmatpush.bf16.msra.mxu0 %v279
      %650 = vmatmul.bf16.gmra.mxu0 %v602
      %v651 = vpop.f32.mrf.mxu0
      %v652 = vadd.f32 0.0, %v651
      %v653 = vpop.f32.mrf.mxu0
      %654 = vdwg.mxu0
      %v655 = vadd.f32 %v598, %v613
      %v656 = vadd.f32 %v599, %v626
      %v657 = vadd.f32 %v600, %v639
      %v658 = vadd.f32 %v601, %v652
      %v659 = vxor.u32 %v655, 2147483648
      %v660 = vmul.f32 %v659, 1.442695
      %v661 = vpow.pop %v660
      %v662 = vadd.f32 %v661, 1.0
      %v663 = vrcp.pop %v662
      %v664 = vmul.f32 %v662, %v663
      %v665 = vsub.f32 1.0, %v664
      %v666 = vmul.f32 %v663, %v665
      %v667 = vadd.f32 %v663, %v666
      %vm668 = vweird.f32 %v662
      %vm669 = vweird.f32 %v663
      %vm670 = vmor %vm668, %vm669
      %v671 = vsel %vm670, %v663, %v667
      %v672 = vand.u32 2147483647, %v662
      %vm673 = vcmp.eq.f32.partialorder %v672, 8.507059e+37
      %v674 = vand.u32 %v662, 2147483648
      %v675 = vor.u32 1.1754944e-38, %v674
      %v676 = vsel %vm673, %v675, %v671
      %v677 = vmul.f32 1.0, %v676
      %v678 = vxor.u32 %v656, 2147483648
      %v679 = vmul.f32 %v678, 1.442695
      %v680 = vpow.pop %v679
      %v681 = vadd.f32 %v680, 1.0
      %v682 = vrcp.pop %v681
      %v683 = vmul.f32 %v681, %v682
      %v684 = vsub.f32 1.0, %v683
      %v685 = vmul.f32 %v682, %v684
      %v686 = vadd.f32 %v682, %v685
      %vm687 = vweird.f32 %v681
      %vm688 = vweird.f32 %v682
      %vm689 = vmor %vm687, %vm688
      %v690 = vsel %vm689, %v682, %v686
      %v691 = vand.u32 2147483647, %v681
      %vm692 = vcmp.eq.f32.partialorder %v691, 8.507059e+37
      %v693 = vand.u32 %v681, 2147483648
      %v694 = vor.u32 1.1754944e-38, %v693
      %v695 = vsel %vm692, %v694, %v690
      %v696 = vmul.f32 1.0, %v695
      %v697 = vtanh.pop %v657
      %v698 = vxor.u32 %v658, 2147483648
      %v699 = vmul.f32 %v698, 1.442695
      %v700 = vpow.pop %v699
      %v701 = vadd.f32 %v700, 1.0
      %v702 = vrcp.pop %v701
      %v703 = vmul.f32 %v701, %v702
      %v704 = vsub.f32 1.0, %v703
      %v705 = vmul.f32 %v702, %v704
      %v706 = vadd.f32 %v702, %v705
      %vm707 = vweird.f32 %v701
      %vm708 = vweird.f32 %v702
      %vm709 = vmor %vm707, %vm708
      %v710 = vsel %vm709, %v702, %v706
      %v711 = vand.u32 2147483647, %v701
      %vm712 = vcmp.eq.f32.partialorder %v711, 8.507059e+37
      %v713 = vand.u32 %v701, 2147483648
      %v714 = vor.u32 1.1754944e-38, %v713
      %v715 = vsel %vm712, %v714, %v710
      %v716 = vmul.f32 1.0, %v715
      %v717 = vmul.f32 %v696, %v596
      %v718 = vmul.f32 %v677, %v697
      %v719 = vadd.f32 %v717, %v718
      %v720 = vtanh.pop %v719
      %v721 = vmul.f32 %v716, %v720
      %s722 = sadd.s32 %s140, 2
      %p723 = scmp.lt.s32.totalorder %s722, 8
      %s724 = scalar_select %p723, 1, 0
      %v725 = vstv %s724
      %vm726 = vcmp.eq.s32.totalorder %v725, 1
      %v727 = vsel %vm726, %v721, %v595
      %v728 = vsel %vm726, %v719, %v596
      %s729 = scalar_lea.vmem %s132, 96
      %v730 = vld [vmem:[%s729] sm:$0xff]
      %v731 = vld [vmem:[%s729 + $0x8] sm:$0xff]
      %v732 = vld [vmem:[%s729 + $0x10] sm:$0xff]
      %v733 = vld [vmem:[%s729 + $0x18] sm:$0xff]
      %v734 = vpack.c.bf16 %v727, %v727
      %735 = vmatpush.bf16.msra.mxu0 %v304
      %736 = vmatpush.bf16.msra.mxu0 %v300
      %737 = vmatpush.bf16.msra.mxu0 %v296
      %738 = vmatpush.bf16.msra.mxu0 %v292
      %739 = vmatpush.bf16.msra.mxu0 %v288
      %740 = vmatpush.bf16.msra.mxu0 %v284
      %741 = vmatpush.bf16.msra.mxu0 %v280
      %742 = vmatpush.bf16.msra.mxu0 %v276
      %743 = vmatmul.bf16.gmra.mxu0 %v734
      %v744 = vpop.f32.mrf.mxu0
      %v745 = vadd.f32 0.0, %v744
      %v746 = vpop.f32.mrf.mxu0
      %747 = vdwg.mxu0
      %748 = vmatpush.bf16.msra.mxu0 %v305
      %749 = vmatpush.bf16.msra.mxu0 %v301
      %750 = vmatpush.bf16.msra.mxu0 %v297
      %751 = vmatpush.bf16.msra.mxu0 %v293
      %752 = vmatpush.bf16.msra.mxu0 %v289
      %753 = vmatpush.bf16.msra.mxu0 %v285
      %754 = vmatpush.bf16.msra.mxu0 %v281
      %755 = vmatpush.bf16.msra.mxu0 %v277
      %756 = vmatmul.bf16.gmra.mxu0 %v734
      %v757 = vpop.f32.mrf.mxu0
      %v758 = vadd.f32 0.0, %v757
      %v759 = vpop.f32.mrf.mxu0
      %760 = vdwg.mxu0
      %761 = vmatpush.bf16.msra.mxu0 %v306
      %762 = vmatpush.bf16.msra.mxu0 %v302
      %763 = vmatpush.bf16.msra.mxu0 %v298
      %764 = vmatpush.bf16.msra.mxu0 %v294
      %765 = vmatpush.bf16.msra.mxu0 %v290
      %766 = vmatpush.bf16.msra.mxu0 %v286
      %767 = vmatpush.bf16.msra.mxu0 %v282
      %768 = vmatpush.bf16.msra.mxu0 %v278
      %769 = vmatmul.bf16.gmra.mxu0 %v734
      %v770 = vpop.f32.mrf.mxu0
      %v771 = vadd.f32 0.0, %v770
      %v772 = vpop.f32.mrf.mxu0
      %773 = vdwg.mxu0
      %774 = vmatpush.bf16.msra.mxu0 %v307
      %775 = vmatpush.bf16.msra.mxu0 %v303
      %776 = vmatpush.bf16.msra.mxu0 %v299
      %777 = vmatpush.bf16.msra.mxu0 %v295
      %778 = vmatpush.bf16.msra.mxu0 %v291
      %779 = vmatpush.bf16.msra.mxu0 %v287
      %780 = vmatpush.bf16.msra.mxu0 %v283
      %781 = vmatpush.bf16.msra.mxu0 %v279
      %782 = vmatmul.bf16.gmra.mxu0 %v734
      %v783 = vpop.f32.mrf.mxu0
      %v784 = vadd.f32 0.0, %v783
      %v785 = vpop.f32.mrf.mxu0
      %786 = vdwg.mxu0
      %v787 = vadd.f32 %v730, %v745
      %v788 = vadd.f32 %v731, %v758
      %v789 = vadd.f32 %v732, %v771
      %v790 = vadd.f32 %v733, %v784
      %v791 = vxor.u32 %v787, 2147483648
      %v792 = vmul.f32 %v791, 1.442695
      %v793 = vpow.pop %v792
      %v794 = vadd.f32 %v793, 1.0
      %v795 = vrcp.pop %v794
      %v796 = vmul.f32 %v794, %v795
      %v797 = vsub.f32 1.0, %v796
      %v798 = vmul.f32 %v795, %v797
      %v799 = vadd.f32 %v795, %v798
      %vm800 = vweird.f32 %v794
      %vm801 = vweird.f32 %v795
      %vm802 = vmor %vm800, %vm801
      %v803 = vsel %vm802, %v795, %v799
      %v804 = vand.u32 2147483647, %v794
      %vm805 = vcmp.eq.f32.partialorder %v804, 8.507059e+37
      %v806 = vand.u32 %v794, 2147483648
      %v807 = vor.u32 1.1754944e-38, %v806
      %v808 = vsel %vm805, %v807, %v803
      %v809 = vmul.f32 1.0, %v808
      %v810 = vxor.u32 %v788, 2147483648
      %v811 = vmul.f32 %v810, 1.442695
      %v812 = vpow.pop %v811
      %v813 = vadd.f32 %v812, 1.0
      %v814 = vrcp.pop %v813
      %v815 = vmul.f32 %v813, %v814
      %v816 = vsub.f32 1.0, %v815
      %v817 = vmul.f32 %v814, %v816
      %v818 = vadd.f32 %v814, %v817
      %vm819 = vweird.f32 %v813
      %vm820 = vweird.f32 %v814
      %vm821 = vmor %vm819, %vm820
      %v822 = vsel %vm821, %v814, %v818
      %v823 = vand.u32 2147483647, %v813
      %vm824 = vcmp.eq.f32.partialorder %v823, 8.507059e+37
      %v825 = vand.u32 %v813, 2147483648
      %v826 = vor.u32 1.1754944e-38, %v825
      %v827 = vsel %vm824, %v826, %v822
      %v828 = vmul.f32 1.0, %v827
      %v829 = vtanh.pop %v789
      %v830 = vxor.u32 %v790, 2147483648
      %v831 = vmul.f32 %v830, 1.442695
      %v832 = vpow.pop %v831
      %v833 = vadd.f32 %v832, 1.0
      %v834 = vrcp.pop %v833
      %v835 = vmul.f32 %v833, %v834
      %v836 = vsub.f32 1.0, %v835
      %v837 = vmul.f32 %v834, %v836
      %v838 = vadd.f32 %v834, %v837
      %vm839 = vweird.f32 %v833
      %vm840 = vweird.f32 %v834
      %vm841 = vmor %vm839, %vm840
      %v842 = vsel %vm841, %v834, %v838
      %v843 = vand.u32 2147483647, %v833
      %vm844 = vcmp.eq.f32.partialorder %v843, 8.507059e+37
      %v845 = vand.u32 %v833, 2147483648
      %v846 = vor.u32 1.1754944e-38, %v845
      %v847 = vsel %vm844, %v846, %v842
      %v848 = vmul.f32 1.0, %v847
      %v849 = vmul.f32 %v828, %v728
      %v850 = vmul.f32 %v809, %v829
      %v851 = vadd.f32 %v849, %v850
      %v852 = vtanh.pop %v851
      %v853 = vmul.f32 %v848, %v852
      %s854 = sadd.s32 %s140, 3
      %p855 = scmp.lt.s32.totalorder %s854, 8
      %s856 = scalar_select %p855, 1, 0
      %v857 = vstv %s856
      %vm858 = vcmp.eq.s32.totalorder %v857, 1
      %v859 = vsel %vm858, %v853, %v727
      %v860 = vsel %vm858, %v851, %v728
      %861 = vst [vmem:[#allocation2] sm:$0xff] %v859
      %862 = vst [vmem:[#allocation3] sm:$0xff] %v860
      %p863 = scmp.eq.s32.totalorder %s13, 1
      // Predicated region
      $region33: #{lstm_forward.1} parent=27 // pred_check
        %p864 = pneg %p863
      $region34: #{lstm_forward.1} parent=27 // pred_check_branch
        %866 = sbr.rel (%p864) target = $region36
      $region35: #{lstm_forward.1} parent=27 // pred_region
        %867 = vst [vmem:[%s2] sm:$0xff] %v859
      $region36: #{lstm_forward.1} parent=27 // pred_fallthru
        _
      // Predicated region
      $region37: #{lstm_forward.1} parent=27 // pred_check
        %p868 = pneg %p73
      $region38: #{lstm_forward.1} parent=27 // pred_check_branch
        %870 = sbr.rel (%p868) target = $region40
      $region39: #{lstm_forward.1} parent=27 // pred_region
        _
      $region40: #{lstm_forward.1} parent=27 // pred_fallthru
        _
      // Predicated region
      $region41: #{lstm_forward.1} parent=27 // pred_check
        %p871 = pneg %p73
      $region42: #{lstm_forward.1} parent=27 // pred_check_branch
        %873 = sbr.rel (%p871) target = $region44
      $region43: #{lstm_forward.1} parent=27 // pred_region
        _
      $region44: #{lstm_forward.1} parent=27 // pred_fallthru
        _
    $region28: #{lstm_forward.1} parent=5 // pred_fallthru
      _
    %p874 = scmp.le.s32.totalorder 2, %s8
    // Predicated region
    $region45: #{lstm_forward.1} parent=5 // pred_check
      %p875 = pneg %p874
    $region46: #{lstm_forward.1} parent=5 // pred_check_branch
      %877 = sbr.rel (%p875) target = $region48
    $region47: #{lstm_forward.1} parent=5 // pred_region
      %s878 = ssub.s32 %s8, 2
    $region48: #{lstm_forward.1} parent=5 // pred_fallthru
      _
  $region6: #{lstm_forward.1} parent=0 // loop_footer
    %s12 = sadd.s32 1, %s8
  $region7: #{lstm_forward.1} parent=0 // loop_footer_branch
    %7 = sbr.rel target = $region3
  $region8: #{lstm_forward.1} parent=0 // loop_exit
    _

</llo_original>
